<compile_context>
chip_gen: v5e
topology: v5e:2x2
jax: 0.10.0
libtpu: 0.0.40
codegen_flags: <defaults>
</compile_context>

<pallas_src>
import functools

import jax
import jax.numpy as jnp
from jax import lax
from jax.experimental import pallas as pl
from jax.experimental.pallas import tpu as pltpu


def _round_up(x, m):
    return ((x + m - 1) // m) * m


def _addnorm_kernel(x_ref, y_ref, w_ref, b_ref, o_ref, *, eps):
    # dropout(p=0.0) / eval-mode dropout is the identity -> plain residual add.
    # TODO(synk): training-mode dropout with p>0 would need pltpu.prng_* masks.
    z = x_ref[...].astype(jnp.float32) + y_ref[...].astype(jnp.float32)  # (tb, D)
    d = z.shape[-1]
    inv_d = jnp.float32(1.0 / d)

    # Row reductions on the MXU (idle in this kernel) instead of the XLU:
    # sum(z) and sum(z*z) as (tb, D) @ (D, 1) matmuls, issued back-to-back.
    ones = jnp.ones((d, 1), dtype=jnp.float32)
    row_sum = jnp.dot(z, ones, preferred_element_type=jnp.float32)        # (tb, 1)
    row_sumsq = jnp.dot(z * z, ones, preferred_element_type=jnp.float32)  # (tb, 1)

    mean = row_sum * inv_d
    var = jnp.maximum(row_sumsq * inv_d - mean * mean, 0.0)  # guard tiny negatives
    inv = lax.rsqrt(var + eps)                                # EUP rsqrt (free slot)

    w = w_ref[...].astype(jnp.float32)   # (1, D), broadcasts over rows
    b = b_ref[...].astype(jnp.float32)   # (1, D)
    o_ref[...] = ((z - mean) * inv * w + b).astype(o_ref.dtype)


def block_addnorm(x, y, weight, bias, *, eps=1e-5, tile_b=None):
    """out = LayerNorm(y + x) over the last dim, with learnable weight/bias.

    x, y:   (..., D) arrays of the same shape/dtype
    weight: (D,) scale   (PyTorch LayerNorm.weight)
    bias:   (D,) shift   (PyTorch LayerNorm.bias)
    """
    assert x.shape == y.shape
    orig_shape = x.shape
    D = orig_shape[-1]
    x2 = x.reshape(-1, D)
    y2 = y.reshape(-1, D)
    B = x2.shape[0]
    itemsize = x.dtype.itemsize
    sublane = 8 if itemsize >= 4 else 16  # f32 vs bf16 sublane pack

    if tile_b is None:
        # ~4 MiB per data block: per-grid-step overhead (~0.35 us) stays <10%
        # even on v7x HBM; small enough to fit every generation's VMEM.
        target_rows = max(sublane, ((4 << 20) // (D * itemsize)) // sublane * sublane)
        # Keep >= ~8 grid steps when the batch allows it (v7x dual-TC sharding
        # + pipeline overlap); irrelevant for small batches.
        steps_rows = _round_up(pl.cdiv(B, 8), sublane)
        tile_b = min(target_rows, steps_rows, _round_up(B, sublane))
    tile_b = max(sublane, _round_up(tile_b, sublane))

    # Hard cap (also for user-supplied tile_b): double-buffered 2 inputs +
    # 1 output + ~4 f32-sized compute temporaries must fit a conservative
    # <= ~44 MiB budget so the limit below never under-provisions and the
    # kernel fits v7x's 64 MiB physical VMEM.
    bytes_per_row = 2 * 2 * D * itemsize + 2 * D * itemsize + 4 * D * 4
    max_rows = max(sublane, (((44 << 20) - (4 << 20)) // bytes_per_row) // sublane * sublane)
    tile_b = min(tile_b, max_rows)

    w2 = weight.reshape(1, D)
    b2 = bias.reshape(1, D)

    grid = (pl.cdiv(B, tile_b),)  # partial trailing block handled by Pallas

    block_bytes = tile_b * D * itemsize
    f32_block = tile_b * D * 4
    param_bytes = 2 * D * 4
    vmem_bytes = int(max(16 << 20,
                         min(48 << 20,
                             6 * block_bytes + 4 * f32_block + 4 * param_bytes + (2 << 20))))

    kernel = functools.partial(_addnorm_kernel, eps=eps)
    out = pl.pallas_call(
        kernel,
        out_shape=jax.ShapeDtypeStruct((B, D), x.dtype),
        grid_spec=pltpu.PrefetchScalarGridSpec(
            num_scalar_prefetch=0,
            grid=grid,
            in_specs=[
                pl.BlockSpec((tile_b, D), lambda i: (i, 0)),
                pl.BlockSpec((tile_b, D), lambda i: (i, 0)),
                pl.BlockSpec((1, D), lambda i: (0, 0)),
                pl.BlockSpec((1, D), lambda i: (0, 0)),
            ],
            out_specs=pl.BlockSpec((tile_b, D), lambda i: (i, 0)),
        ),
        compiler_params=pltpu.CompilerParams(
            dimension_semantics=("parallel",),
            vmem_limit_bytes=vmem_bytes,
        ),
    )(x2, y2, w2, b2)

    return out.reshape(orig_shape)


def _reference(x, y, weight, bias, eps=1e-5):
    z = (x + y).astype(jnp.float32)
    mean = jnp.mean(z, axis=-1, keepdims=True)
    var = jnp.mean((z - mean) ** 2, axis=-1, keepdims=True)
    out = (z - mean) / jnp.sqrt(var + eps) * weight + bias
    return out.astype(x.dtype)


if __name__ == "__main__":
    key = jax.random.PRNGKey(0)
    kx, ky, kw, kb = jax.random.split(key, 4)

    D = 128  # lane-dense hidden dim (LayerNorm normalized shape)
    # PyTorch LayerNorm initializes weight=1, bias=0; perturb so the affine
    # part is actually exercised (deterministic).
    weight = 1.0 + 0.1 * jax.random.normal(kw, (D,), dtype=jnp.float32)
    bias = 0.1 * jax.random.normal(kb, (D,), dtype=jnp.float32)

    # One exact-tile batch and one ragged batch (exercises the partial
    # trailing block path that replaced pad/slice).
    for shape in [(2, 8, D), (3, 7, D)]:
        x = jax.random.normal(kx, shape, dtype=jnp.float32)
        y = jax.random.normal(ky, shape, dtype=jnp.float32)

        out = jax.block_until_ready(block_addnorm(x, y, weight, bias))
        ref = _reference(x, y, weight, bias)

        assert out.shape == ref.shape and out.dtype == ref.dtype
        assert jnp.allclose(out, ref, atol=1e-4, rtol=1e-4), f"mismatch vs reference for {shape}"

    print("KERNEL_OK")
</pallas_src>

<mosaic_0001>
module attributes {stable_mosaic.version = 11 : i64} {
  func.func @_addnorm_kernel(%arg0: i32, %arg1: memref<8x128xf32, #tpu.memory_space<vmem>>, %arg2: memref<8x128xf32, #tpu.memory_space<vmem>>, %arg3: memref<1x128xf32, #tpu.memory_space<vmem>>, %arg4: memref<1x128xf32, #tpu.memory_space<vmem>>, %arg5: memref<8x128xf32, #tpu.memory_space<vmem>>) attributes {dimension_semantics = [#tpu.dimension_semantics<parallel>], iteration_bounds = array<i64: 2>, scalar_prefetch = 0 : i64, scratch_operands = 0 : i64, tpu.core_type = #tpu.core_type<tc>, window_params = [{transform_indices = @transform_0, window_bounds = array<i64: 8, 128>}, {transform_indices = @transform_1, window_bounds = array<i64: 8, 128>}, {pipeline_mode = #tpu.pipeline_mode<synchronous>, transform_indices = @transform_2, window_bounds = array<i64: 1, 128>}, {pipeline_mode = #tpu.pipeline_mode<synchronous>, transform_indices = @transform_3, window_bounds = array<i64: 1, 128>}, {transform_indices = @transform_4, window_bounds = array<i64: 8, 128>}]} {
    %c0 = arith.constant 0 : index
    %c0_0 = arith.constant 0 : index
    %0 = vector.load %arg1[%c0, %c0_0] : memref<8x128xf32, #tpu.memory_space<vmem>>, vector<8x128xf32>
    %c0_1 = arith.constant 0 : index
    %c0_2 = arith.constant 0 : index
    %1 = vector.load %arg2[%c0_1, %c0_2] : memref<8x128xf32, #tpu.memory_space<vmem>>, vector<8x128xf32>
    %2 = arith.addf %0, %1 : vector<8x128xf32>
    %cst = arith.constant 1.000000e+00 : f32
    %3 = vector.broadcast %cst : f32 to vector<128x1xf32>
    %cst_3 = arith.constant dense<0.000000e+00> : vector<8x1xf32>
    %4 = tpu.matmul %2, %3, %cst_3 {dimension_numbers = #tpu.dot_dimension_numbers<[1], [0], [0], [1], [0, 0, 1, 1], [], []>} : vector<8x128xf32>, vector<128x1xf32>, vector<8x1xf32> -> vector<8x1xf32>
    %5 = arith.mulf %2, %2 : vector<8x128xf32>
    %cst_4 = arith.constant dense<0.000000e+00> : vector<8x1xf32>
    %6 = tpu.matmul %5, %3, %cst_4 {dimension_numbers = #tpu.dot_dimension_numbers<[1], [0], [0], [1], [0, 0, 1, 1], [], []>} : vector<8x128xf32>, vector<128x1xf32>, vector<8x1xf32> -> vector<8x1xf32>
    %cst_5 = arith.constant 7.812500e-03 : f32
    %7 = vector.broadcast %cst_5 : f32 to vector<8x1xf32>
    %8 = arith.mulf %4, %7 : vector<8x1xf32>
    %cst_6 = arith.constant 7.812500e-03 : f32
    %9 = vector.broadcast %cst_6 : f32 to vector<8x1xf32>
    %10 = arith.mulf %6, %9 : vector<8x1xf32>
    %11 = arith.mulf %8, %8 : vector<8x1xf32>
    %12 = arith.subf %10, %11 : vector<8x1xf32>
    %cst_7 = arith.constant 0.000000e+00 : f32
    %13 = vector.broadcast %cst_7 : f32 to vector<8x1xf32>
    %14 = arith.maximumf %12, %13 : vector<8x1xf32>
    %cst_8 = arith.constant 9.99999974E-6 : f32
    %15 = vector.broadcast %cst_8 : f32 to vector<8x1xf32>
    %16 = arith.addf %14, %15 : vector<8x1xf32>
    %17 = math.rsqrt %16 : vector<8x1xf32>
    %c0_9 = arith.constant 0 : index
    %c0_10 = arith.constant 0 : index
    %18 = vector.load %arg3[%c0_9, %c0_10] : memref<1x128xf32, #tpu.memory_space<vmem>>, vector<1x128xf32>
    %c0_11 = arith.constant 0 : index
    %c0_12 = arith.constant 0 : index
    %19 = vector.load %arg4[%c0_11, %c0_12] : memref<1x128xf32, #tpu.memory_space<vmem>>, vector<1x128xf32>
    %20 = vector.broadcast %8 : vector<8x1xf32> to vector<8x128xf32>
    %21 = arith.subf %2, %20 : vector<8x128xf32>
    %22 = vector.broadcast %17 : vector<8x1xf32> to vector<8x128xf32>
    %23 = arith.mulf %21, %22 : vector<8x128xf32>
    %24 = vector.broadcast %18 : vector<1x128xf32> to vector<8x128xf32>
    %25 = arith.mulf %23, %24 : vector<8x128xf32>
    %26 = vector.broadcast %19 : vector<1x128xf32> to vector<8x128xf32>
    %27 = arith.addf %25, %26 : vector<8x128xf32>
    %c0_13 = arith.constant 0 : index
    %c0_14 = arith.constant 0 : index
    %28 = vector.load %arg5[%c0_13, %c0_14] : memref<8x128xf32, #tpu.memory_space<vmem>>, vector<8x128xf32>
    tpu.vector_store %arg5[%c0_13, %c0_14], %27 {strides = array<i32>} : memref<8x128xf32, #tpu.memory_space<vmem>>, vector<8x128xf32>,
    return
  }
  func.func @transform_0(%arg0: i32) -> (i32, i32) {
    %c0_i32 = arith.constant 0 : i32
    %c0_i32_0 = arith.constant 0 : i32
    return %arg0, %c0_i32 : i32, i32
  }
  func.func @transform_1(%arg0: i32) -> (i32, i32) {
    %c0_i32 = arith.constant 0 : i32
    %c0_i32_0 = arith.constant 0 : i32
    return %arg0, %c0_i32 : i32, i32
  }
  func.func @transform_2(%arg0: i32) -> (i32, i32) {
    %c0_i32 = arith.constant 0 : i32
    %c0_i32_0 = arith.constant 0 : i32
    %c0_i32_1 = arith.constant 0 : i32
    return %c0_i32, %c0_i32_0 : i32, i32
  }
  func.func @transform_3(%arg0: i32) -> (i32, i32) {
    %c0_i32 = arith.constant 0 : i32
    %c0_i32_0 = arith.constant 0 : i32
    %c0_i32_1 = arith.constant 0 : i32
    return %c0_i32, %c0_i32_0 : i32, i32
  }
  func.func @transform_4(%arg0: i32) -> (i32, i32) {
    %c0_i32 = arith.constant 0 : i32
    %c0_i32_0 = arith.constant 0 : i32
    return %arg0, %c0_i32 : i32, i32
  }
}

</mosaic_0001>

<llo_original>
// kernel: tpu_custom_call.1
$region0: #{tpu_custom_call.1}
  #allocation0 [shape = 'u32[]', space=smem, size = 0x4, offset = 0x4, fixed_abs, tag = 'smem constant byte address 0x4 - core index']
  #allocation1 [shape = 'u32[72,128]{1,0:T(1,128)}', space=vmem, size = 0x9000, scoped, tag = 'internal scratch']
  %s0 = inlined_call_operand.hbm [shape: f32[16,128], index: 0, kind: input, shape index: {}]
  %s1 = inlined_call_operand.hbm [shape: f32[16,128], index: 1, kind: input, shape index: {}]
  %s2 = inlined_call_operand.vmem [shape: f32[1,128], index: 2, kind: input, shape index: {}]
  %s3 = inlined_call_operand.vmem [shape: f32[1,128], index: 3, kind: input, shape index: {}]
  %s4 = inlined_call_operand.hbm [shape: f32[16,128], index: 4, kind: output, shape index: {}]
  %s5 = sld [smem:[#allocation0]]
  $region57: #{tpu_custom_call.1} parent=0
    _
  %s7 = ssub.s32 1, %s5
  %s8 = scalar_select 0, %s7, %s5
  $region1: #{tpu_custom_call.1} parent=0
    #allocation2 [shape = 'u8[8192]{0}', space=vmem, size = 0x2000, scoped, tag = 'input window, operand 0']
    #allocation3 [shape = 's32[2]{0}', space=sflag, size = 0x8, scoped, tag = 'scoped memory for tpu_custom_call.1']
    #allocation4 [shape = 's32[2]{0}', space=sflag, size = 0x8, scoped, tag = 'scoped memory for tpu_custom_call.1']
    #allocation5 [shape = 'u8[8192]{0}', space=vmem, size = 0x2000, scoped, tag = 'input window, operand 1']
    #allocation6 [shape = 's32[2]{0}', space=sflag, size = 0x8, scoped, tag = 'scoped memory for tpu_custom_call.1']
    #allocation7 [shape = 'u8[8192]{0}', space=vmem, size = 0x2000, scoped, tag = 'output window, operand 0']
    %9 = vsyncpa [#allocation3], 0
    %s10 = scalar_lea.sflag [#allocation3], 1
    %11 = vsyncpa %s10, 0
    %12 = vsyncpa [#allocation6], 0
    %s13 = scalar_lea.sflag [#allocation6], 1
    %14 = vsyncpa %s13, 0
    %15 = vsyncpa [#allocation4], 0
    %s16 = scalar_lea.sflag [#allocation4], 1
    %17 = vsyncpa %s16, 0
    loop: start=0, step=1, limit=4
    $region2: #{tpu_custom_call.1} parent=1 // loop_pre_header
      _
    $region3: #{tpu_custom_call.1} parent=1 // loop_header
      %s19 = sphi 0, %s23
      %p20 = scmp.ge.s32.totalorder %s19, 4
      %s29 = sphi 0, %s31
      %s32 = sphi 0, %s29
      %s33 = sphi 0, %s32
      %s49 = sphi 0, %s33
      %s55 = sphi 0, %s57
      %s58 = sphi 0, %s55
      %s59 = sphi 0, %s58
      %s75 = sphi 0, %s59
      %s79 = sphi 0, %s79
      %s81 = sphi 0, %s79
      %s82 = sphi 0, %s81
      %s96 = sphi 0, %s82
      %s100 = sphi 0, %s100
      %s102 = sphi 0, %s100
      %s103 = sphi 0, %s102
      %s117 = sphi 0, %s103
      %s123 = sphi 0, %s125
      %s126 = sphi 0, %s123
      %s127 = sphi 0, %s126
      %s143 = sphi 0, %s127
    $region4: #{tpu_custom_call.1} parent=1 // loop_header_branch
      %22 = sbr.rel (%p20) target = $region8
    $region5: #{tpu_custom_call.1} parent=1 // loop_body
      %s24 = ssub.s32 %s19, 1
      %s25 = ssub.s32 %s19, 2
      %s26 = sadd.s32 %s19, 1
      %s27 = ssub.s32 %s19, %s26
      %p28 = scmp.eq.s32.totalorder %s27, 0
      %s30 = sadd.s32 %s29, 1
      %s31 = scalar_select %p28, %s29, %s30
      %p34 = pneg %p28
      %p35 = scmp.eq.s32.totalorder %s19, 1
      %p36 = por %p34, %p35
      %p37 = scmp.ne.s32.totalorder %s29, %s32
      %p38 = scmp.eq.s32.totalorder %s19, 0
      %p39 = por %p37, %p38
      %p40 = scmp.ne.s32.totalorder %s29, %s32
      %p41 = scmp.eq.s32.totalorder %s24, 1
      %p42 = por %p40, %p41
      %p43 = scmp.ne.s32.totalorder %s32, %s33
      %p44 = scmp.eq.s32.totalorder %s24, 0
      %p45 = por %p43, %p44
      %p46 = scmp.ne.s32.totalorder %s32, %s33
      %p47 = scmp.eq.s32.totalorder %s25, 1
      %p48 = por %p46, %p47
      %p50 = scmp.ne.s32.totalorder %s33, %s49
      %p51 = scmp.eq.s32.totalorder %s25, 0
      %p52 = por %p50, %p51
      %s53 = ssub.s32 %s19, %s26
      %p54 = scmp.eq.s32.totalorder %s53, 0
      %s56 = sadd.s32 %s55, 1
      %s57 = scalar_select %p54, %s55, %s56
      %p60 = pneg %p54
      %p61 = scmp.eq.s32.totalorder %s19, 1
      %p62 = por %p60, %p61
      %p63 = scmp.ne.s32.totalorder %s55, %s58
      %p64 = scmp.eq.s32.totalorder %s19, 0
      %p65 = por %p63, %p64
      %p66 = scmp.ne.s32.totalorder %s55, %s58
      %p67 = scmp.eq.s32.totalorder %s24, 1
      %p68 = por %p66, %p67
      %p69 = scmp.ne.s32.totalorder %s58, %s59
      %p70 = scmp.eq.s32.totalorder %s24, 0
      %p71 = por %p69, %p70
      %p72 = scmp.ne.s32.totalorder %s58, %s59
      %p73 = scmp.eq.s32.totalorder %s25, 1
      %p74 = por %p72, %p73
      %p76 = scmp.ne.s32.totalorder %s59, %s75
      %p77 = scmp.eq.s32.totalorder %s25, 0
      %p78 = por %p76, %p77
      %s80 = sadd.s32 %s79, 1
      %p83 = scmp.eq.s32.totalorder %s19, 1
      %p84 = scmp.ne.s32.totalorder %s79, %s81
      %p85 = scmp.eq.s32.totalorder %s19, 0
      %p86 = por %p84, %p85
      %p87 = scmp.ne.s32.totalorder %s79, %s81
      %p88 = scmp.eq.s32.totalorder %s24, 1
      %p89 = por %p87, %p88
      %p90 = scmp.ne.s32.totalorder %s81, %s82
      %p91 = scmp.eq.s32.totalorder %s24, 0
      %p92 = por %p90, %p91
      %p93 = scmp.ne.s32.totalorder %s81, %s82
      %p94 = scmp.eq.s32.totalorder %s25, 1
      %p95 = por %p93, %p94
      %p97 = scmp.ne.s32.totalorder %s82, %s96
      %p98 = scmp.eq.s32.totalorder %s25, 0
      %p99 = por %p97, %p98
      %s101 = sadd.s32 %s100, 1
      %p104 = scmp.eq.s32.totalorder %s19, 1
      %p105 = scmp.ne.s32.totalorder %s100, %s102
      %p106 = scmp.eq.s32.totalorder %s19, 0
      %p107 = por %p105, %p106
      %p108 = scmp.ne.s32.totalorder %s100, %s102
      %p109 = scmp.eq.s32.totalorder %s24, 1
      %p110 = por %p108, %p109
      %p111 = scmp.ne.s32.totalorder %s102, %s103
      %p112 = scmp.eq.s32.totalorder %s24, 0
      %p113 = por %p111, %p112
      %p114 = scmp.ne.s32.totalorder %s102, %s103
      %p115 = scmp.eq.s32.totalorder %s25, 1
      %p116 = por %p114, %p115
      %p118 = scmp.ne.s32.totalorder %s103, %s117
      %p119 = scmp.eq.s32.totalorder %s25, 0
      %p120 = por %p118, %p119
      %s121 = ssub.s32 %s19, %s26
      %p122 = scmp.eq.s32.totalorder %s121, 0
      %s124 = sadd.s32 %s123, 1
      %s125 = scalar_select %p122, %s123, %s124
      %p128 = pneg %p122
      %p129 = scmp.eq.s32.totalorder %s19, 1
      %p130 = por %p128, %p129
      %p131 = scmp.ne.s32.totalorder %s123, %s126
      %p132 = scmp.eq.s32.totalorder %s19, 0
      %p133 = por %p131, %p132
      %p134 = scmp.ne.s32.totalorder %s123, %s126
      %p135 = scmp.eq.s32.totalorder %s24, 1
      %p136 = por %p134, %p135
      %p137 = scmp.ne.s32.totalorder %s126, %s127
      %p138 = scmp.eq.s32.totalorder %s24, 0
      %p139 = por %p137, %p138
      %p140 = scmp.ne.s32.totalorder %s126, %s127
      %p141 = scmp.eq.s32.totalorder %s25, 1
      %p142 = por %p140, %p141
      %p144 = scmp.ne.s32.totalorder %s127, %s143
      %p145 = scmp.eq.s32.totalorder %s25, 0
      %p146 = por %p144, %p145
      %p147 = scmp.le.s32.totalorder 1, %s19
      %p148 = scmp.lt.s32.totalorder %s19, 3
      %p149 = pnand %p147, %p148
      %p150 = pneg %p149
      // Predicated region
      $region9: #{tpu_custom_call.1} parent=5 // pred_check
        _
      $region10: #{tpu_custom_call.1} parent=5 // pred_check_branch
        %152 = sbr.rel (%p149) target = $region12
      $region11: #{tpu_custom_call.1} parent=5 // pred_region
        %s153 = ssub.s32 %s19, 1
        // Predicated region
        $region13: #{tpu_custom_call.1} parent=11 // pred_check
          %p154 = pneg %p92
        $region14: #{tpu_custom_call.1} parent=11 // pred_check_branch
          %156 = sbr.rel (%p154) target = $region16
        $region15: #{tpu_custom_call.1} parent=11 // pred_region
          _
        $region16: #{tpu_custom_call.1} parent=11 // pred_fallthru
          _
        // Predicated region
        $region17: #{tpu_custom_call.1} parent=11 // pred_check
          %p157 = pneg %p113
        $region18: #{tpu_custom_call.1} parent=11 // pred_check_branch
          %159 = sbr.rel (%p157) target = $region20
        $region19: #{tpu_custom_call.1} parent=11 // pred_region
          _
        $region20: #{tpu_custom_call.1} parent=11 // pred_fallthru
          _
      $region12: #{tpu_custom_call.1} parent=5 // pred_fallthru
        _
      %p160 = scmp.lt.s32.totalorder %s19, 2
      // Predicated region
      $region21: #{tpu_custom_call.1} parent=5 // pred_check
        %p161 = pneg %p160
      $region22: #{tpu_custom_call.1} parent=5 // pred_check_branch
        %163 = sbr.rel (%p161) target = $region24
      $region23: #{tpu_custom_call.1} parent=5 // pred_region
        // Predicated region
        $region25: #{tpu_custom_call.1} parent=23 // pred_check
          %p164 = pneg %p39
        $region26: #{tpu_custom_call.1} parent=23 // pred_check_branch
          %166 = sbr.rel (%p164) target = $region28
        $region27: #{tpu_custom_call.1} parent=23 // pred_region
          %s167 = sand.u32 %s29, 1
          %s168 = scalar_lea.sflag [#allocation3], %s167
          %s169 = sand.u32 %s29, 1
          %s170 = smul.addr %s169, 8
          %s171 = scalar_lea.vmem [#allocation2], %s170
          %173 = vsyncadd %s168, 0
          %s174 = smul.addr %s19, 8
          %s175 = scalar_lea.hbm %s0, %s174
          %s177 = sshll.u32 %s175, 4
          %s178 = int_to_ptr.hbm [resolvable:$true] %s177
          %s179 = sshll.u32 %s171, 4
          %s180 = int_to_ptr.vmem [resolvable:$true] %s179
          %182 = dma.hbm_to_vmem [thread:$0]  %s178, 128, %s180, %s168
        $region28: #{tpu_custom_call.1} parent=23 // pred_fallthru
          _
        // Predicated region
        $region29: #{tpu_custom_call.1} parent=23 // pred_check
          %p183 = pneg %p65
        $region30: #{tpu_custom_call.1} parent=23 // pred_check_branch
          %185 = sbr.rel (%p183) target = $region32
        $region31: #{tpu_custom_call.1} parent=23 // pred_region
          %s186 = sand.u32 %s55, 1
          %s187 = scalar_lea.sflag [#allocation6], %s186
          %s188 = sand.u32 %s55, 1
          %s189 = smul.addr %s188, 8
          %s190 = scalar_lea.vmem [#allocation5], %s189
          %192 = vsyncadd %s187, 0
          %s193 = smul.addr %s19, 8
          %s194 = scalar_lea.hbm %s1, %s193
          %s196 = sshll.u32 %s194, 4
          %s197 = int_to_ptr.hbm [resolvable:$true] %s196
          %s198 = sshll.u32 %s190, 4
          %s199 = int_to_ptr.vmem [resolvable:$true] %s198
          %201 = dma.hbm_to_vmem [thread:$0]  %s197, 128, %s199, %s187
        $region32: #{tpu_custom_call.1} parent=23 // pred_fallthru
          _
      $region24: #{tpu_custom_call.1} parent=5 // pred_fallthru
        _
      %p202 = scmp.le.s32.totalorder 1, %s19
      %p203 = scmp.lt.s32.totalorder %s19, 3
      %p204 = pnand %p202, %p203
      %p205 = pneg %p204
      // Predicated region
      $region33: #{tpu_custom_call.1} parent=5 // pred_check
        _
      $region34: #{tpu_custom_call.1} parent=5 // pred_check_branch
        %207 = sbr.rel (%p204) target = $region36
      $region35: #{tpu_custom_call.1} parent=5 // pred_region
        %s208 = ssub.s32 %s19, 1
        %s209 = sand.u32 %s32, 1
        %s210 = scalar_lea.sflag [#allocation3], %s209
        %s211 = sand.u32 %s32, 1
        %s212 = smul.addr %s211, 8
        %s213 = scalar_lea.vmem [#allocation2], %s212
        // Predicated region
        $region37: #{tpu_custom_call.1} parent=35 // pred_check
          %p214 = pneg %p45
        $region38: #{tpu_custom_call.1} parent=35 // pred_check_branch
          %216 = sbr.rel (%p214) target = $region40
        $region39: #{tpu_custom_call.1} parent=35 // pred_region
          %218 = dma.done %s210, 128
        $region40: #{tpu_custom_call.1} parent=35 // pred_fallthru
          _
        %s219 = sand.u32 %s58, 1
        %s220 = scalar_lea.sflag [#allocation6], %s219
        %s221 = sand.u32 %s58, 1
        %s222 = smul.addr %s221, 8
        %s223 = scalar_lea.vmem [#allocation5], %s222
        // Predicated region
        $region41: #{tpu_custom_call.1} parent=35 // pred_check
          %p224 = pneg %p71
        $region42: #{tpu_custom_call.1} parent=35 // pred_check_branch
          %226 = sbr.rel (%p224) target = $region44
        $region43: #{tpu_custom_call.1} parent=35 // pred_region
          %228 = dma.done %s220, 128
        $region44: #{tpu_custom_call.1} parent=35 // pred_fallthru
          _
        %s229 = sand.u32 %s32, 1
        %s230 = scalar_lea.sflag [#allocation3], %s229
        %s231 = sand.u32 %s32, 1
        %s232 = smul.addr %s231, 8
        %s233 = scalar_lea.vmem [#allocation2], %s232
        %p234 = pneg %p45
        %p235 = pneg %p42
        %s236 = sand.u32 %s58, 1
        %s237 = scalar_lea.sflag [#allocation6], %s236
        %s238 = sand.u32 %s58, 1
        %s239 = smul.addr %s238, 8
        %s240 = scalar_lea.vmem [#allocation5], %s239
        %p241 = pneg %p71
        %p242 = pneg %p68
        %p243 = pneg %p92
        %p244 = pneg %p89
        %p245 = pneg %p113
        %p246 = pneg %p110
        %p247 = pneg %p139
        %p248 = pneg %p136
        %s249 = sand.u32 %s126, 1
        %s250 = scalar_lea.sflag [#allocation4], %s249
        %s251 = sand.u32 %s126, 1
        %s252 = smul.addr %s251, 8
        %s253 = scalar_lea.vmem [#allocation7], %s252
        %v254 = vld [vmem:[%s213] sm:$0xff]
        %v255 = vld [vmem:[%s223] sm:$0xff]
        %v256 = vadd.f32 %v254, %v255
        %257 = vmatpush.msra.mxu0 1.0
        %258 = vmatpush.msra.mxu0 1.0
        %259 = vmatpush.msra.mxu0 1.0
        %260 = vmatpush.msra.mxu0 1.0
        %261 = vmatpush.msra.mxu0 1.0
        %262 = vmatpush.msra.mxu0 1.0
        %263 = vmatpush.msra.mxu0 1.0
        %264 = vmatpush.msra.mxu0 1.0
        %265 = vmatpush.msra.mxu0 1.0
        %266 = vmatpush.msra.mxu0 1.0
        %267 = vmatpush.msra.mxu0 1.0
        %268 = vmatpush.msra.mxu0 1.0
        %269 = vmatpush.msra.mxu0 1.0
        %270 = vmatpush.msra.mxu0 1.0
        %271 = vmatpush.msra.mxu0 1.0
        %272 = vmatpush.msra.mxu0 1.0
        %273 = vmatmul.f32.gmra.mxu0 %v256
        %v274 = vpop.f32.mrf.mxu0
        %v275 = vadd.f32 0.0, %v274
        %276 = vdwg.mxu0
        %v277 = vmul.f32 %v256, %v256
        %278 = vmatpush.msra.mxu0 1.0
        %279 = vmatpush.msra.mxu0 1.0
        %280 = vmatpush.msra.mxu0 1.0
        %281 = vmatpush.msra.mxu0 1.0
        %282 = vmatpush.msra.mxu0 1.0
        %283 = vmatpush.msra.mxu0 1.0
        %284 = vmatpush.msra.mxu0 1.0
        %285 = vmatpush.msra.mxu0 1.0
        %286 = vmatpush.msra.mxu0 1.0
        %287 = vmatpush.msra.mxu0 1.0
        %288 = vmatpush.msra.mxu0 1.0
        %289 = vmatpush.msra.mxu0 1.0
        %290 = vmatpush.msra.mxu0 1.0
        %291 = vmatpush.msra.mxu0 1.0
        %292 = vmatpush.msra.mxu0 1.0
        %293 = vmatpush.msra.mxu0 1.0
        %294 = vmatmul.f32.gmra.mxu0 %v277
        %v295 = vpop.f32.mrf.mxu0
        %v296 = vadd.f32 0.0, %v295
        %297 = vdwg.mxu0
        %v298 = vmul.f32 %v275, 0.0078125
        %v299 = vmul.f32 %v296, 0.0078125
        %v300 = vmul.f32 %v298, %v298
        %v301 = vsub.f32 %v299, %v300
        %v302 = vmax.f32 %v301, 0.0
        %v303 = vadd.f32 %v302, 1e-05
        %v304 = vrsqrt.pop %v303
        %v305 = vmul.f32 %v304, %v303
        %v306 = vmul.f32 %v305, %v304
        %v307 = vmul.f32 0.5, %v306
        %v308 = vsub.f32 1.5, %v307
        %v309 = vmul.f32 %v304, %v308
        %vm310 = vweird.f32 %v303
        %vm311 = vweird.f32 %v304
        %vm312 = vmor %vm310, %vm311
        %v313 = vsel %vm312, %v304, %v309
        %v314 = vld [vmem:[%s2] sm:$0x1]
        %v315 = vld [vmem:[%s3] sm:$0x1]
        %317 = vset.pattern.permute.xlu0 0
        %318 = vperm.xlu0 %317, %v298
        %v319 = vpop.permute.xlu0 %318
        %v321 = vsub.f32 %v256, %v319
        %323 = vset.pattern.permute.xlu0 0
        %324 = vperm.xlu0 %323, %v313
        %v325 = vpop.permute.xlu0 %324
        %v327 = vmul.f32 %v321, %v325
        %v329 = vperm.slane %v314, 0
        %v331 = vmul.f32 %v327, %v329
        %v333 = vperm.slane %v315, 0
        %v335 = vadd.f32 %v331, %v333
        %336 = vst [vmem:[%s253] sm:$0xff] %v335
        %s337 = sand.u32 %s126, 1
        %s338 = scalar_lea.sflag [#allocation4], %s337
        %s339 = sand.u32 %s126, 1
        %s340 = smul.addr %s339, 8
        %s341 = scalar_lea.vmem [#allocation7], %s340
        // Predicated region
        $region45: #{tpu_custom_call.1} parent=35 // pred_check
          %p342 = pneg %p136
        $region46: #{tpu_custom_call.1} parent=35 // pred_check_branch
          %344 = sbr.rel (%p342) target = $region48
        $region47: #{tpu_custom_call.1} parent=35 // pred_region
          %346 = vsyncadd %s338, 0
          %s347 = smul.addr %s24, 8
          %s348 = scalar_lea.hbm %s4, %s347
          %s350 = sshll.u32 %s341, 4
          %s351 = int_to_ptr.vmem [resolvable:$true] %s350
          %s352 = sshll.u32 %s348, 4
          %s353 = int_to_ptr.hbm [resolvable:$true] %s352
          %355 = dma.vmem_to_hbm [thread:$0]  %s351, 128, %s353, %s338
        $region48: #{tpu_custom_call.1} parent=35 // pred_fallthru
          _
      $region36: #{tpu_custom_call.1} parent=5 // pred_fallthru
        _
      %p356 = scmp.le.s32.totalorder 2, %s19
      // Predicated region
      $region49: #{tpu_custom_call.1} parent=5 // pred_check
        %p357 = pneg %p356
      $region50: #{tpu_custom_call.1} parent=5 // pred_check_branch
        %359 = sbr.rel (%p357) target = $region52
      $region51: #{tpu_custom_call.1} parent=5 // pred_region
        %s360 = ssub.s32 %s19, 2
        // Predicated region
        $region53: #{tpu_custom_call.1} parent=51 // pred_check
          %p361 = pneg %p142
        $region54: #{tpu_custom_call.1} parent=51 // pred_check_branch
          %363 = sbr.rel (%p361) target = $region56
        $region55: #{tpu_custom_call.1} parent=51 // pred_region
          %s364 = sand.u32 %s127, 1
          %s365 = scalar_lea.sflag [#allocation4], %s364
          %s366 = sand.u32 %s127, 1
          %s367 = smul.addr %s366, 8
          %s368 = scalar_lea.vmem [#allocation7], %s367
          %370 = dma.done %s365, 128
        $region56: #{tpu_custom_call.1} parent=51 // pred_fallthru
          _
      $region52: #{tpu_custom_call.1} parent=5 // pred_fallthru
        _
    $region6: #{tpu_custom_call.1} parent=1 // loop_footer
      %s23 = sadd.s32 1, %s19
    $region7: #{tpu_custom_call.1} parent=1 // loop_footer_branch
      %18 = sbr.rel target = $region3
    $region8: #{tpu_custom_call.1} parent=1 // loop_exit
      _
    %371 = vsyncpa [#allocation3], 1
    %s372 = scalar_lea.sflag [#allocation3], 1
    %373 = vsyncpa %s372, 1
    %374 = vsyncpa [#allocation6], 1
    %s375 = scalar_lea.sflag [#allocation6], 1
    %376 = vsyncpa %s375, 1
    %377 = vsyncpa [#allocation4], 1
    %s378 = scalar_lea.sflag [#allocation4], 1
    %379 = vsyncpa %s378, 1

</llo_original>
